<compile_context>
chip_gen: v5e
topology: v5e:2x2
jax: 0.10.0
libtpu: 0.0.40
codegen_flags: <defaults>
</compile_context>

<pallas_src>
import jax
import jax.numpy as jnp
from jax import lax
from jax.experimental import pallas as pl
from jax.experimental.pallas import tpu as pltpu


def _round_up(x, m):
    return (x + m - 1) // m * m


def _pair_partial_sum(g, is_diag, out_ref):
    """Write sum of squared (strictly-upper-triangular if diagonal block)
    Gram entries, splatted across the lane-dense output tile."""
    tm, tn = g.shape

    @pl.when(jnp.logical_not(is_diag))
    def _():
        # Off-diagonal block pair: every (row, col) is a valid i<j pair.
        s = jnp.sum(g * g)
        out_ref[...] = jnp.broadcast_to(s, out_ref.shape).astype(out_ref.dtype)

    @pl.when(is_diag)
    def _():
        # Diagonal block pair: strict upper triangle only (local indices
        # suffice since row0 == col0).  Zero-padded rows contribute 0.
        gi = lax.broadcasted_iota(jnp.int32, (tm, tn), 0)
        gj = lax.broadcasted_iota(jnp.int32, (tm, tn), 1)
        s = jnp.sum(jnp.where(gj > gi, g * g, 0.0))
        out_ref[...] = jnp.broadcast_to(s, out_ref.shape).astype(out_ref.dtype)


def _ortho_pair_kernel_single(blk_i_ref, blk_j_ref,   # scalar prefetch (SMEM)
                              pi_ref, pj_ref,         # (tm, tk), (tn, tk) bf16
                              out_ref):               # (8, 128) f32 per pair
    # Full-K contraction in a single MXU dot (internal accumulation; MRB on
    # v7x) — no VMEM accumulator round-trip.
    t = pl.program_id(0)
    g = lax.dot_general(
        pi_ref[...], pj_ref[...],
        dimension_numbers=(((1,), (1,)), ((), ())),
        preferred_element_type=jnp.float32)
    _pair_partial_sum(g, blk_i_ref[t] == blk_j_ref[t], out_ref)


def _ortho_pair_kernel_multi(blk_i_ref, blk_j_ref,    # scalar prefetch (SMEM)
                             pi_ref, pj_ref,          # (tm, tk), (tn, tk) bf16
                             out_ref,                 # (8, 128) f32 per pair
                             gram_acc):               # (tm, tn) f32 scratch
    # Fallback for very large D (nk > 1): accumulate the Gram tile across k.
    t = pl.program_id(0)
    k = pl.program_id(1)
    nk = pl.num_programs(1)

    @pl.when(k == 0)
    def _():
        gram_acc[...] = jnp.zeros_like(gram_acc)

    gram_acc[...] += lax.dot_general(
        pi_ref[...], pj_ref[...],
        dimension_numbers=(((1,), (1,)), ((), ())),
        preferred_element_type=jnp.float32)

    @pl.when(k == nk - 1)
    def _():
        _pair_partial_sum(gram_acc[...], blk_i_ref[t] == blk_j_ref[t], out_ref)


def orthogonal_loss(prototypes):
    """prototypes: (N, D) float array of stacked prototype vectors.

    Returns scalar f32: sum_{i<j} cos_sim(p_i, p_j)^2 / ((N^2 + N) / 2).
    """
    p = jnp.asarray(prototypes, dtype=jnp.float32)
    n, d = p.shape
    normalizer = (n * n + n) / 2.0          # matches the PyTorch module

    # Pre-normalize rows in f32.  NOTE: per-row clamp of ||p|| at 1e-8 vs the
    # PyTorch clamp of the product of norms — only differs for near-zero
    # prototypes.
    norms = jnp.sqrt(jnp.sum(p * p, axis=-1, keepdims=True))
    p_unit = p / jnp.maximum(norms, 1e-8)

    # Row tile: multiple of 16 (bf16 sublane packing), capped at 512 — enough
    # arithmetic intensity (~tm/4 flops/byte) to leave the HBM roofline on
    # v5e/v6e/v7x without padding tiny N up to 128/256.
    tm = tn = min(512, _round_up(n, 16))
    # Feature tile: full D when it fits so nk == 1 (single dot per pair).
    tk = min(2048, _round_up(d, 128))
    n_pad = _round_up(n, tm)
    d_pad = _round_up(d, tk)

    # Zero-padded unit rows contribute exactly 0 to every Gram entry.
    p_pad = jnp.zeros((n_pad, d_pad), jnp.float32).at[:n, :d].set(p_unit)
    p_bf16 = p_pad.astype(jnp.bfloat16)     # bf16 MXU feed, halves HBM bytes

    nb = n_pad // tm
    nk = d_pad // tk

    # Upper-triangular (i_blk <= j_blk) block pairs only; consecutive pairs
    # share blk_i, so the pi tile is not re-DMAed between them.
    pairs = [(i, j) for i in range(nb) for j in range(i, nb)]
    n_pairs = len(pairs)
    blk_i = jnp.asarray([ij[0] for ij in pairs], dtype=jnp.int32)
    blk_j = jnp.asarray([ij[1] for ij in pairs], dtype=jnp.int32)

    cost = pl.CostEstimate(
        flops=2 * n_pairs * tm * tn * d_pad,
        transcendentals=0,
        bytes_accessed=n_pairs * (tm + tn) * d_pad * 2 + n_pairs * 8 * 128 * 4,
    )

    if nk == 1:
        kernel = _ortho_pair_kernel_single
        grid_spec = pltpu.PrefetchScalarGridSpec(
            num_scalar_prefetch=2,
            grid=(n_pairs,),
            in_specs=[
                pl.BlockSpec((tm, tk), lambda t, bi, bj: (bi[t], 0)),
                pl.BlockSpec((tn, tk), lambda t, bi, bj: (bj[t], 0)),
            ],
            out_specs=pl.BlockSpec((8, 128), lambda t, bi, bj: (t, 0)),
        )
        dim_sem = ("parallel",)
    else:
        kernel = _ortho_pair_kernel_multi
        grid_spec = pltpu.PrefetchScalarGridSpec(
            num_scalar_prefetch=2,
            grid=(n_pairs, nk),
            in_specs=[
                pl.BlockSpec((tm, tk), lambda t, k, bi, bj: (bi[t], k)),
                pl.BlockSpec((tn, tk), lambda t, k, bi, bj: (bj[t], k)),
            ],
            out_specs=pl.BlockSpec((8, 128), lambda t, k, bi, bj: (t, 0)),
            scratch_shapes=[pltpu.VMEM((tm, tn), jnp.float32)],
        )
        dim_sem = ("parallel", "arbitrary")

    out = pl.pallas_call(
        kernel,
        out_shape=jax.ShapeDtypeStruct((n_pairs * 8, 128), jnp.float32),
        grid_spec=grid_spec,
        compiler_params=pltpu.CompilerParams(
            dimension_semantics=dim_sem,
            vmem_limit_bytes=32 * 1024 * 1024,   # fits v7x's 64 MiB physical
        ),
        cost_estimate=cost,
    )(blk_i, blk_j, p_bf16, p_bf16)

    # Each pair's partial sum was splatted across its (8, 128) tile.
    partials = out.reshape(n_pairs, 8, 128)[:, 0, 0]
    return jnp.sum(partials) / normalizer


def _reference_loss(prototypes):
    # Plain-JAX f32 reference mirroring the PyTorch double loop.
    p = jnp.asarray(prototypes, dtype=jnp.float32)
    n = p.shape[0]
    sims = []
    for i in range(n):
        for j in range(i + 1, n):
            a, b = p[i], p[j]
            cs = jnp.dot(a, b) / jnp.maximum(
                jnp.linalg.norm(a) * jnp.linalg.norm(b), 1e-8
            )
            sims.append(cs ** 2)
    return jnp.sum(jnp.stack(sims)) / ((n ** 2 + n) / 2)


if __name__ == "__main__":
    # Deterministic synthetic prototypes (stand-in for the module's dict):
    # N = 8 prototypes of hidden dim D = 128.
    key = jax.random.PRNGKey(0)
    N, D = 8, 128
    prototypes = jax.random.normal(key, (N, D), dtype=jnp.float32)

    loss = orthogonal_loss(prototypes)
    loss = jax.block_until_ready(loss)

    ref = _reference_loss(prototypes)
    # bf16 MXU feed -> loosened tolerance vs f32 reference (norms are f32 now).
    assert jnp.allclose(loss, ref, rtol=5e-2, atol=1e-3), (loss, ref)

    print("KERNEL_OK")
</pallas_src>

<mosaic_0001>
module attributes {stable_mosaic.version = 11 : i64} {
  func.func @_ortho_pair_kernel_single(%arg0: i32, %arg1: memref<1xi32, #tpu.memory_space<smem>>, %arg2: memref<1xi32, #tpu.memory_space<smem>>, %arg3: memref<16x128xbf16, #tpu.memory_space<vmem>>, %arg4: memref<16x128xbf16, #tpu.memory_space<vmem>>, %arg5: memref<8x128xf32, #tpu.memory_space<vmem>>) attributes {dimension_semantics = [#tpu.dimension_semantics<parallel>], iteration_bounds = array<i64: 1>, scalar_prefetch = 2 : i64, scratch_operands = 0 : i64, tpu.core_type = #tpu.core_type<tc>, window_params = [{transform_indices = @transform_0, window_bounds = array<i64: 16, 128>}, {transform_indices = @transform_1, window_bounds = array<i64: 16, 128>}, {transform_indices = @transform_2, window_bounds = array<i64: 8, 128>}]} {
    %c0 = arith.constant 0 : index
    %c0_0 = arith.constant 0 : index
    %0 = vector.load %arg3[%c0, %c0_0] : memref<16x128xbf16, #tpu.memory_space<vmem>>, vector<16x128xbf16>
    %c0_1 = arith.constant 0 : index
    %c0_2 = arith.constant 0 : index
    %1 = vector.load %arg4[%c0_1, %c0_2] : memref<16x128xbf16, #tpu.memory_space<vmem>>, vector<16x128xbf16>
    %cst = arith.constant dense<0.000000e+00> : vector<16x16xf32>
    %2 = tpu.matmul %0, %1, %cst {dimension_numbers = #tpu.dot_dimension_numbers<[1], [1], [0], [0], [0, 0, 1, 0], [], []>} : vector<16x128xbf16>, vector<16x128xbf16>, vector<16x16xf32> -> vector<16x16xf32>
    %3 = arith.index_cast %arg0 : i32 to index
    %4 = memref.load %arg1[%3] : memref<1xi32, #tpu.memory_space<smem>>
    %5 = arith.index_cast %arg0 : i32 to index
    %6 = memref.load %arg2[%5] : memref<1xi32, #tpu.memory_space<smem>>
    %7 = arith.cmpi eq, %4, %6 : i32
    %true = arith.constant true
    %8 = arith.xori %7, %true : i1
    %9 = arith.extui %8 : i1 to i32
    %c0_i32 = arith.constant 0 : i32
    %10 = arith.cmpi ne, %9, %c0_i32 : i32
    scf.if %10 {
      %13 = arith.mulf %2, %2 : vector<16x16xf32>
      %14 = vector.shape_cast %13 : vector<16x16xf32> to vector<1x16x16xf32>
      %cst_4 = arith.constant dense<0.000000e+00> : vector<1xf32>
      %15 = vector.multi_reduction <add>, %14, %cst_4 [1, 2] : vector<1x16x16xf32> to vector<1xf32>
      %16 = vector.shape_cast %15 : vector<1xf32> to vector<1x1x1xf32>
      %17 = vector.extract %16[0, 0, 0] : f32 from vector<1x1x1xf32>
      %18 = vector.broadcast %17 : f32 to vector<8x128xf32>
      %c0_5 = arith.constant 0 : index
      %c0_6 = arith.constant 0 : index
      %19 = vector.load %arg5[%c0_5, %c0_6] : memref<8x128xf32, #tpu.memory_space<vmem>>, vector<8x128xf32>
      tpu.vector_store %arg5[%c0_5, %c0_6], %18 {strides = array<i32>} : memref<8x128xf32, #tpu.memory_space<vmem>>, vector<8x128xf32>,
    } else {
    }
    %11 = arith.extui %7 : i1 to i32
    %c0_i32_3 = arith.constant 0 : i32
    %12 = arith.cmpi ne, %11, %c0_i32_3 : i32
    scf.if %12 {
      %13 = tpu.iota {dimensions = array<i32: 0>} : vector<16x16xi32>
      %14 = tpu.iota {dimensions = array<i32: 1>} : vector<16x16xi32>
      %15 = arith.cmpi sgt, %14, %13 : vector<16x16xi32>
      %16 = arith.mulf %2, %2 : vector<16x16xf32>
      %cst_4 = arith.constant 0.000000e+00 : f32
      %17 = vector.broadcast %cst_4 : f32 to vector<16x16xf32>
      %18 = arith.select %15, %16, %17 : vector<16x16xi1>, vector<16x16xf32>
      %19 = vector.shape_cast %18 : vector<16x16xf32> to vector<1x16x16xf32>
      %cst_5 = arith.constant dense<0.000000e+00> : vector<1xf32>
      %20 = vector.multi_reduction <add>, %19, %cst_5 [1, 2] : vector<1x16x16xf32> to vector<1xf32>
      %21 = vector.shape_cast %20 : vector<1xf32> to vector<1x1x1xf32>
      %22 = vector.extract %21[0, 0, 0] : f32 from vector<1x1x1xf32>
      %23 = vector.broadcast %22 : f32 to vector<8x128xf32>
      %c0_6 = arith.constant 0 : index
      %c0_7 = arith.constant 0 : index
      %24 = vector.load %arg5[%c0_6, %c0_7] : memref<8x128xf32, #tpu.memory_space<vmem>>, vector<8x128xf32>
      tpu.vector_store %arg5[%c0_6, %c0_7], %23 {strides = array<i32>} : memref<8x128xf32, #tpu.memory_space<vmem>>, vector<8x128xf32>,
    } else {
    }
    return
  }
  func.func @transform_0(%arg0: i32, %arg1: memref<1xi32, #tpu.memory_space<smem>>, %arg2: memref<1xi32, #tpu.memory_space<smem>>) -> (i32, i32) {
    %0 = arith.index_cast %arg0 : i32 to index
    %1 = memref.load %arg1[%0] : memref<1xi32, #tpu.memory_space<smem>>
    %c0_i32 = arith.constant 0 : i32
    %c0_i32_0 = arith.constant 0 : i32
    return %1, %c0_i32 : i32, i32
  }
  func.func @transform_1(%arg0: i32, %arg1: memref<1xi32, #tpu.memory_space<smem>>, %arg2: memref<1xi32, #tpu.memory_space<smem>>) -> (i32, i32) {
    %0 = arith.index_cast %arg0 : i32 to index
    %1 = memref.load %arg2[%0] : memref<1xi32, #tpu.memory_space<smem>>
    %c0_i32 = arith.constant 0 : i32
    %c0_i32_0 = arith.constant 0 : i32
    return %1, %c0_i32 : i32, i32
  }
  func.func @transform_2(%arg0: i32, %arg1: memref<1xi32, #tpu.memory_space<smem>>, %arg2: memref<1xi32, #tpu.memory_space<smem>>) -> (i32, i32) {
    %c0_i32 = arith.constant 0 : i32
    %c0_i32_0 = arith.constant 0 : i32
    return %arg0, %c0_i32 : i32, i32
  }
}

</mosaic_0001>

<llo_original>
// kernel: tpu_custom_call.1
$region0: #{tpu_custom_call.1}
  #allocation0 [shape = 'u32[]', space=smem, size = 0x4, offset = 0x4, fixed_abs, tag = 'smem constant byte address 0x4 - core index']
  #allocation1 [shape = 'u32[72,128]{1,0:T(1,128)}', space=vmem, size = 0x9000, scoped, tag = 'internal scratch']
  #allocation2 [shape = 's32[1]{0}', space=sflag, size = 0x4, scoped, tag = 'scoped memory for tpu_custom_call.1']
  #allocation3 [shape = 's32[1]{0:T(128)S(6)}', space=smem, size = 0x200, scoped, tag = 'prefetched SMEM operand 0']
  #allocation4 [shape = 's32[1]{0:T(128)S(6)}', space=smem, size = 0x200, scoped, tag = 'prefetched SMEM operand 1']
  %s0 = inlined_call_operand.<no memory space> [shape: s32[1], index: 0, kind: input, shape index: {}]
  %s1 = inlined_call_operand.<no memory space> [shape: s32[1], index: 1, kind: input, shape index: {}]
  %s2 = inlined_call_operand.hbm [shape: bf16[16,128], index: 2, kind: input, shape index: {}]
  %s3 = inlined_call_operand.hbm [shape: bf16[16,128], index: 3, kind: input, shape index: {}]
  %s4 = inlined_call_operand.hbm [shape: f32[8,128], index: 4, kind: output, shape index: {}]
  %s5 = sld [smem:[#allocation0]]
  $region34: #{tpu_custom_call.1} parent=0
    _
  %s7 = ssub.s32 1, %s5
  %s8 = scalar_select 0, %s7, %s5
  %9 = sst [smem:[#allocation3]] %s0
  %10 = sst [smem:[#allocation4]] %s1
  $region1: #{tpu_custom_call.1} parent=0
    #allocation5 [shape = 'u8[4096]{0}', space=vmem, size = 0x1000, scoped, tag = 'input window, operand 2, single buffered']
    #allocation6 [shape = 's32[1]{0}', space=sflag, size = 0x4, scoped, tag = 'scoped memory for tpu_custom_call.1']
    #allocation7 [shape = 's32[1]{0}', space=sflag, size = 0x4, scoped, tag = 'scoped memory for tpu_custom_call.1']
    #allocation8 [shape = 'u8[4096]{0}', space=vmem, size = 0x1000, scoped, tag = 'input window, operand 3, single buffered']
    #allocation9 [shape = 's32[1]{0}', space=sflag, size = 0x4, scoped, tag = 'scoped memory for tpu_custom_call.1']
    #allocation10 [shape = 'u8[4096]{0}', space=vmem, size = 0x1000, scoped, tag = 'output window, operand 0, single buffered']
    %11 = vsyncpa [#allocation6], 0
    %12 = vsyncpa [#allocation9], 0
    %13 = vsyncpa [#allocation7], 0
    // Predicated region
    $region2: #{tpu_custom_call.1} parent=1 // pred_check
      _
    $region3: #{tpu_custom_call.1} parent=1 // pred_check_branch
      %15 = sbr.rel (0) target = $region5
    $region4: #{tpu_custom_call.1} parent=1 // pred_region
      %s16 = sld [smem:[#allocation3]]
      %s17 = smul.u32 2, %s16
      %19 = vsyncadd [#allocation6], 0
      %s20 = smul.addr %s17, 4
      %s21 = scalar_lea.hbm %s2, %s20
      %s22 = sshll.u32 %s21, 4
      %s23 = int_to_ptr.hbm [resolvable:$true] %s22
      %s24 = sshll.u32 [#allocation5], 4
      %s25 = int_to_ptr.vmem [resolvable:$true] %s24
      %30 = dma.hbm_to_vmem [thread:$0]  %s23, 128, %s25, [#allocation6], 64, 64, 4
    $region5: #{tpu_custom_call.1} parent=1 // pred_fallthru
      _
    // Predicated region
    $region6: #{tpu_custom_call.1} parent=1 // pred_check
      _
    $region7: #{tpu_custom_call.1} parent=1 // pred_check_branch
      %32 = sbr.rel (0) target = $region9
    $region8: #{tpu_custom_call.1} parent=1 // pred_region
      %s33 = sld [smem:[#allocation4]]
      %s34 = smul.u32 2, %s33
      %36 = vsyncadd [#allocation9], 0
      %s37 = smul.addr %s34, 4
      %s38 = scalar_lea.hbm %s3, %s37
      %s39 = sshll.u32 %s38, 4
      %s40 = int_to_ptr.hbm [resolvable:$true] %s39
      %s41 = sshll.u32 [#allocation8], 4
      %s42 = int_to_ptr.vmem [resolvable:$true] %s41
      %47 = dma.hbm_to_vmem [thread:$0]  %s40, 128, %s42, [#allocation9], 64, 64, 4
    $region9: #{tpu_custom_call.1} parent=1 // pred_fallthru
      _
    // Predicated region
    $region10: #{tpu_custom_call.1} parent=1 // pred_check
      _
    $region11: #{tpu_custom_call.1} parent=1 // pred_check_branch
      %49 = sbr.rel (0) target = $region13
    $region12: #{tpu_custom_call.1} parent=1 // pred_region
      %51 = dma.done [#allocation6], 128
    $region13: #{tpu_custom_call.1} parent=1 // pred_fallthru
      _
    // Predicated region
    $region14: #{tpu_custom_call.1} parent=1 // pred_check
      _
    $region15: #{tpu_custom_call.1} parent=1 // pred_check_branch
      %53 = sbr.rel (0) target = $region17
    $region16: #{tpu_custom_call.1} parent=1 // pred_region
      %55 = dma.done [#allocation9], 128
    $region17: #{tpu_custom_call.1} parent=1 // pred_fallthru
      _
    %s56 = sld [smem:[#allocation3]]
    %s57 = smul.u32 2, %s56
    %s58 = sld [smem:[#allocation4]]
    %s59 = smul.u32 2, %s58
    %v61 = vld [vmem:[#allocation5] sm:$0xf]
    %v62 = vld [vmem:[#allocation5 + $0x4] sm:$0xf]
    %v63 = vld [vmem:[#allocation8] sm:$0xf]
    %v64 = vld [vmem:[#allocation8 + $0x4] sm:$0xf]
    %v67 = vunpack.c.l.b16 %v61
    %v68 = vunpack.c.l.b16 %v62
    %v69 = vpack.c.b16 %v68, %v67
    %v73 = vunpack.c.l.b16 %v63
    %v74 = vunpack.c.l.b16 %v64
    %v75 = vpack.c.b16 %v74, %v73
    %77 = vmatpush.bf16.xpose.msra.mxu0 0
    %78 = vmatpush.bf16.xpose.msra.mxu0 0
    %79 = vmatpush.bf16.xpose.msra.mxu0 0
    %80 = vmatpush.bf16.xpose.msra.mxu0 0
    %81 = vmatpush.bf16.xpose.msra.mxu0 0
    %82 = vmatpush.bf16.xpose.msra.mxu0 0
    %83 = vmatpush.bf16.xpose.msra.mxu0 0
    %84 = vmatpush.bf16.xpose.msra.mxu0 %v75
    %85 = vmatmul.bf16.gmra.mxu0 %v69
    %v86 = vpop.f32.mrf.mxu0
    %v87 = vadd.f32 0.0, %v86
    %v88 = vpop.f32.mrf.mxu0
    %v89 = vadd.f32 0.0, %v88
    %90 = vdwg.mxu0
    %s91 = sld [smem:[#allocation3]]
    %s92 = sld [smem:[#allocation4]]
    %p93 = scmp.eq.s32.totalorder %s91, %s92
    %p94 = scmp.ne.s32.totalorder %s91, %s92
    // Predicated region
    $region18: #{tpu_custom_call.1} parent=1 // pred_check
      %p95 = pneg %p94
    $region19: #{tpu_custom_call.1} parent=1 // pred_check_branch
      %97 = sbr.rel (%p95) target = $region21
    $region20: #{tpu_custom_call.1} parent=1 // pred_region
      %v98 = vmul.f32 %v87, %v87
      %v99 = vmul.f32 %v89, %v89
      %vm100 = vcmask 130048
      %v101 = vsel %vm100, %v98, 0.0
      %v102 = vsel %vm100, %v99, 0.0
      %v103 = vadd.f32 %v101, %v102
      %104 = vadd.xlane.f32.xlu0 %v103
      %v105 = vpop.xlane.xlu0 %104
      %v106 = vrot.slane %v105, 4
      %v107 = vadd.f32 %v105, %v106
      %v108 = vrot.slane %v107, 2
      %v109 = vadd.f32 %v107, %v108
      %v110 = vrot.slane %v109, 1
      %v111 = vadd.f32 %v109, %v110
      %s112 = vtos %v111
      %v113 = vstv %s112
      %114 = vst [vmem:[#allocation10] sm:$0xff] %v113
    $region21: #{tpu_custom_call.1} parent=1 // pred_fallthru
      _
    // Predicated region
    $region22: #{tpu_custom_call.1} parent=1 // pred_check
      %p115 = pneg %p93
    $region23: #{tpu_custom_call.1} parent=1 // pred_check_branch
      %117 = sbr.rel (%p115) target = $region25
    $region24: #{tpu_custom_call.1} parent=1 // pred_region
      %v118 = vlaneseq
      %v119 = vshrl.u32 %v118, 7
      %v120 = vadd.s32 %v119, 8
      %v121 = vlaneseq
      %v122 = vand.u32 %v121, 127
      %vm123 = vcmp.gt.s32.totalorder %v122, %v119
      %vm124 = vcmp.gt.s32.totalorder %v122, %v120
      %v125 = vmul.f32 %v87, %v87
      %v126 = vmul.f32 %v89, %v89
      %v127 = vsel %vm123, %v125, 0.0
      %v128 = vsel %vm124, %v126, 0.0
      %vm129 = vcmask 130048
      %v130 = vsel %vm129, %v127, 0.0
      %v131 = vsel %vm129, %v128, 0.0
      %v132 = vadd.f32 %v130, %v131
      %133 = vadd.xlane.f32.xlu0 %v132
      %v134 = vpop.xlane.xlu0 %133
      %v135 = vrot.slane %v134, 4
      %v136 = vadd.f32 %v134, %v135
      %v137 = vrot.slane %v136, 2
      %v138 = vadd.f32 %v136, %v137
      %v139 = vrot.slane %v138, 1
      %v140 = vadd.f32 %v138, %v139
      %s141 = vtos %v140
      %v142 = vstv %s141
      %143 = vst [vmem:[#allocation10] sm:$0xff] %v142
    $region25: #{tpu_custom_call.1} parent=1 // pred_fallthru
      _
    // Predicated region
    $region26: #{tpu_custom_call.1} parent=1 // pred_check
      _
    $region27: #{tpu_custom_call.1} parent=1 // pred_check_branch
      %145 = sbr.rel (0) target = $region29
    $region28: #{tpu_custom_call.1} parent=1 // pred_region
      %147 = vsyncadd [#allocation7], 0
      %s149 = sshll.u32 [#allocation10], 4
      %s150 = int_to_ptr.vmem [resolvable:$true] %s149
      %s151 = sshll.u32 %s4, 4
      %s152 = int_to_ptr.hbm [resolvable:$true] %s151
      %154 = dma.vmem_to_hbm [thread:$0]  %s150, 128, %s152, [#allocation7]
    $region29: #{tpu_custom_call.1} parent=1 // pred_fallthru
      _
    // Predicated region
    $region30: #{tpu_custom_call.1} parent=1 // pred_check
      _
    $region31: #{tpu_custom_call.1} parent=1 // pred_check_branch
      %156 = sbr.rel (0) target = $region33
    $region32: #{tpu_custom_call.1} parent=1 // pred_region
      %158 = dma.done [#allocation7], 128
    $region33: #{tpu_custom_call.1} parent=1 // pred_fallthru
      _
    %159 = vsyncpa [#allocation6], 1
    %160 = vsyncpa [#allocation9], 1
    %161 = vsyncpa [#allocation7], 1

</llo_original>
